<compile_context>
chip_gen: v6e
topology: v6e:2x2x1
jax: 0.10.0
libtpu: 0.0.40
codegen_flags: <defaults>
</compile_context>

<pallas_src>
import functools

import jax
import jax.numpy as jnp
from jax.experimental import pallas as pl
from jax.experimental.pallas import tpu as pltpu


def _round_up(x, n):
    return (x + n - 1) // n * n


def elastic_arcface_kernel(hit_ref, emb_ref, w_ref, inv_en_ref, label_ref,
                           cosm_ref, sinm_ref, out_ref, inv_wn_ref, *, s):
    # hit_ref:    (nc*nb,) i32 SMEM  1 if tile (j,i) contains a labelled column
    # emb_ref:    (TB, D)  raw (un-normalized) embeddings
    # w_ref:      (D, TC)  raw weight columns for this class tile
    # inv_en_ref: (TB, 1)  f32  1/||emb_row||  (precomputed once in wrapper)
    # label_ref:  (TB, 1)  i32  class index, -1 => no margin for this row
    # cosm_ref:   (TB, 1)  f32  cos(per-row margin)
    # sinm_ref:   (TB, 1)  f32  sin(per-row margin)
    # out_ref:    (TB, TC) f32  scaled logits
    # inv_wn_ref: (1, TC)  f32  VMEM scratch: 1/||w_col|| for this class tile
    j = pl.program_id(0)          # class-tile index (outer, "parallel")
    i = pl.program_id(1)          # batch-tile index (inner, "arbitrary")
    nb = pl.num_programs(1)

    # Column norms: once per class tile (first batch iteration), reused for the
    # rest of the batch from VMEM scratch.  One cheap XLU sublane-reduce over D.
    @pl.when(i == 0)
    def _():
        w32 = w_ref[...].astype(jnp.float32)
        inv_wn_ref[...] = jax.lax.rsqrt(
            jnp.sum(w32 * w32, axis=0, keepdims=True))

    # Raw inner products on the MXU; fold both L2 normalizations in afterwards
    # as a (row scale) * (column scale) broadcast multiply.  clip AFTER both
    # scales so the margin identity stays exact.
    raw = jnp.dot(emb_ref[...], w_ref[...], preferred_element_type=jnp.float32)
    cos_t = jnp.clip(raw * inv_en_ref[...] * inv_wn_ref[...], -1.0, 1.0)

    tile_has_label = hit_ref[j * nb + i] != 0

    @pl.when(tile_has_label)
    def _():
        # sin(theta) with theta = acos(cos_t) in [0, pi]  =>  sin >= 0
        sin_t = jnp.sqrt(jnp.maximum(1.0 - cos_t * cos_t, 0.0))
        label = label_ref[...]                                       # (TB, 1)
        col = (jax.lax.broadcasted_iota(jnp.int32, cos_t.shape, 1)
               + j * cos_t.shape[1])
        hit = (col == label) & (label != -1)
        # cos(acos(c) + m) = c*cos(m) - sin(theta)*sin(m); unchanged elsewhere.
        out_ref[...] = jnp.where(
            hit, cos_t * cosm_ref[...] - sin_t * sinm_ref[...], cos_t) * s

    @pl.when(jnp.logical_not(tile_has_label))
    def _():
        out_ref[...] = cos_t * s


def elastic_arcface_forward(embeddings, weight, label, margin_key,
                            s=64.0, m=0.5, std=0.05, use_bf16=False,
                            block_c=None):
    """Pallas ElasticArcFace forward.

    embeddings: (B, D) float32
    weight:     (D, C) float32  (the nn.Parameter `kernel`)
    label:      (B,)   int32    (class index, -1 => no margin for that row)
    Returns (logits (B, C) float32, margin (B, 1) float32).
    """
    B, D = embeddings.shape
    C = weight.shape[1]

    # Per-row random margin ~ N(m, std)  (torch.normal analog; wrapper glue).
    margin = m + std * jax.random.normal(margin_key, (B, 1), dtype=jnp.float32)
    cos_m = jnp.cos(margin)
    sin_m = jnp.sin(margin)

    # ----- generation-aware tiling ---------------------------------------
    try:
        vmem_cap = int(pltpu.get_tpu_info().vmem_capacity_bytes)
    except Exception:
        vmem_cap = 64 * 2**20            # conservative (v7x-sized) fallback
    if vmem_cap >= 96 * 2**20:           # v5e / v6e: 128 MiB VMEM
        tc_cap, vmem_target = 1024, 96 * 2**20
    else:                                # v7x: 64 MiB VMEM per TensorCore
        tc_cap, vmem_target = 512, 48 * 2**20

    sub = 16 if use_bf16 else 8
    tb = min(_round_up(B, sub), 256)
    tc = min(_round_up(C, 128), tc_cap)
    if block_c is not None:              # explicit override (tests / tuning)
        tc = block_c
    Bp = _round_up(B, tb)
    Cp = _round_up(C, tc)

    compute_dtype = jnp.bfloat16 if use_bf16 else jnp.float32

    # Padding for ragged B / C.  Zero-width pads are elided by XLA; for truly
    # ragged huge C, pad the parameter once outside the train step instead.
    emb_p = jnp.pad(embeddings.astype(compute_dtype),
                    ((0, Bp - B), (0, 0)), constant_values=1.0)
    w_p = jnp.pad(weight.astype(compute_dtype),
                  ((0, 0), (0, Cp - C)), constant_values=1.0)
    label_p = jnp.pad(label.astype(jnp.int32), (0, Bp - B),
                      constant_values=-1).reshape(Bp, 1)
    cosm_p = jnp.pad(cos_m, ((0, Bp - B), (0, 0)))
    sinm_p = jnp.pad(sin_m, ((0, Bp - B), (0, 0)))

    # Per-row embedding norm: computed once here, not once per class tile.
    emb32 = embeddings.astype(jnp.float32)
    inv_en = jax.lax.rsqrt(jnp.sum(emb32 * emb32, axis=1, keepdims=True))
    inv_en_p = jnp.pad(inv_en, ((0, Bp - B), (0, 0)), constant_values=1.0)

    nb = Bp // tb
    nc = Cp // tc

    # Tiny "tile (j, i) contains a labelled column" table, prefetched to SMEM.
    lab_flat = label_p.reshape(Bp)
    ct = jnp.where(lab_flat >= 0, lab_flat // tc, nc)       # nc == OOB sentinel
    rt = jnp.arange(Bp, dtype=jnp.int32) // tb
    hit_tbl = jnp.zeros((nc, nb), jnp.int32).at[ct, rt].add(1, mode="drop")
    hit_flat = hit_tbl.reshape(nc * nb)                     # 1-D => cheap SMEM

    kernel = functools.partial(elastic_arcface_kernel, s=s)

    itemsize = 2 if use_bf16 else 4
    step_bytes = itemsize * (tb * D + D * tc) + 4 * (4 * tb + tc + tb * tc)
    vmem_limit = int(min(max(4 * step_bytes, 16 * 2**20), vmem_target))

    cost = pl.CostEstimate(
        flops=2 * Bp * D * Cp,
        transcendentals=Cp + Bp * tc,
        bytes_accessed=itemsize * (Bp * D * nc + D * Cp) + 4 * Bp * Cp,
    )

    grid_spec = pltpu.PrefetchScalarGridSpec(
        num_scalar_prefetch=1,
        grid=(nc, nb),                    # class outer, batch inner
        in_specs=[
            pl.BlockSpec((tb, D), lambda j, i, hit: (i, 0)),   # embeddings
            # TODO(synk): on v5e consider pipeline_mode=pl.Buffered(3) on the
            # weight spec to hide the weight-tile DMA when nb == 1.
            pl.BlockSpec((D, tc), lambda j, i, hit: (0, j)),   # weight tile
            pl.BlockSpec((tb, 1), lambda j, i, hit: (i, 0)),   # 1/||emb_row||
            pl.BlockSpec((tb, 1), lambda j, i, hit: (i, 0)),   # labels
            pl.BlockSpec((tb, 1), lambda j, i, hit: (i, 0)),   # cos(margin)
            pl.BlockSpec((tb, 1), lambda j, i, hit: (i, 0)),   # sin(margin)
        ],
        out_specs=pl.BlockSpec((tb, tc), lambda j, i, hit: (i, j)),
        scratch_shapes=[pltpu.VMEM((1, tc), jnp.float32)],     # 1/||w_col||
    )

    out_p = pl.pallas_call(
        kernel,
        out_shape=jax.ShapeDtypeStruct((Bp, Cp), jnp.float32),
        grid_spec=grid_spec,
        compiler_params=pltpu.CompilerParams(
            # Only the class axis is megacore-parallel: each (D, tc) weight
            # tile is streamed from HBM by exactly one core and reused across
            # every batch tile.
            dimension_semantics=("parallel", "arbitrary"),
            vmem_limit_bytes=vmem_limit),
        cost_estimate=cost,
    )(hit_flat, emb_p, w_p, inv_en_p, label_p, cosm_p, sinm_p)

    return out_p[:B, :C], margin


def _reference(embeddings, weight, label, margin, s):
    # Pure-JAX reference following the PyTorch code literally.
    e = embeddings / jnp.linalg.norm(embeddings, axis=1, keepdims=True)
    w = weight / jnp.linalg.norm(weight, axis=0, keepdims=True)
    cos_t = jnp.clip(e @ w, -1.0, 1.0)
    theta = jnp.arccos(cos_t)
    B, C = cos_t.shape
    one_hot = (jax.lax.broadcasted_iota(jnp.int32, (B, C), 1)
               == label.reshape(B, 1)) & (label.reshape(B, 1) != -1)
    theta = theta + jnp.where(one_hot, margin, 0.0)
    return jnp.cos(theta) * s


if __name__ == "__main__":
    key = jax.random.PRNGKey(0)
    k_emb, k_w, k_lab, k_margin = jax.random.split(key, 4)

    B, D, C = 16, 32, 256          # batch, in_features, out_features
    s, m_, std = 64.0, 0.5, 0.05

    embeddings = jax.random.normal(k_emb, (B, D), dtype=jnp.float32)
    # nn.init.normal_(kernel, std=0.01) with shape (in_features, out_features)
    weight = 0.01 * jax.random.normal(k_w, (D, C), dtype=jnp.float32)
    # Labels restricted to [0, 128) and block_c=128 so class tile 1 contains no
    # labels -> exercises both the gated margin path and the cold path.
    label = jax.random.randint(k_lab, (B,), 0, 128, dtype=jnp.int32)
    label = label.at[3].set(-1)    # exercise the "label == -1 -> no margin" path

    out, margin = elastic_arcface_forward(embeddings, weight, label, k_margin,
                                          s=s, m=m_, std=std, block_c=128)
    out = jax.block_until_ready(out)

    # Sanity check against a pure-JAX reference (same margin samples).
    ref = _reference(embeddings, weight, label, margin, s)
    assert out.shape == (B, C)
    assert jnp.max(jnp.abs(out - ref)) < 2e-3
    print("KERNEL_OK")
</pallas_src>

<mosaic_0001>
module attributes {stable_mosaic.version = 11 : i64} {
  func.func @elastic_arcface_kernel(%arg0: i32, %arg1: i32, %arg2: memref<2xi32, #tpu.memory_space<smem>>, %arg3: memref<16x32xf32, #tpu.memory_space<vmem>>, %arg4: memref<32x128xf32, #tpu.memory_space<vmem>>, %arg5: memref<16x1xf32, #tpu.memory_space<vmem>>, %arg6: memref<16x1xi32, #tpu.memory_space<vmem>>, %arg7: memref<16x1xf32, #tpu.memory_space<vmem>>, %arg8: memref<16x1xf32, #tpu.memory_space<vmem>>, %arg9: memref<16x128xf32, #tpu.memory_space<vmem>>, %arg10: memref<1x128xf32, #tpu.memory_space<vmem>>) attributes {dimension_semantics = [#tpu.dimension_semantics<parallel>, #tpu.dimension_semantics<arbitrary>], iteration_bounds = array<i64: 2, 1>, scalar_prefetch = 1 : i64, scratch_operands = 1 : i64, tpu.core_type = #tpu.core_type<tc>, window_params = [{transform_indices = @transform_0, window_bounds = array<i64: 16, 32>}, {transform_indices = @transform_1, window_bounds = array<i64: 32, 128>}, {transform_indices = @transform_2, window_bounds = array<i64: 16, 1>}, {transform_indices = @transform_3, window_bounds = array<i64: 16, 1>}, {transform_indices = @transform_4, window_bounds = array<i64: 16, 1>}, {transform_indices = @transform_5, window_bounds = array<i64: 16, 1>}, {transform_indices = @transform_6, window_bounds = array<i64: 16, 128>}]} {
    %c0_i32 = arith.constant 0 : i32
    %0 = arith.cmpi eq, %arg1, %c0_i32 : i32
    %1 = arith.extui %0 : i1 to i32
    %c0_i32_0 = arith.constant 0 : i32
    %2 = arith.cmpi ne, %1, %c0_i32_0 : i32
    scf.if %2 {
      %c0_13 = arith.constant 0 : index
      %c0_14 = arith.constant 0 : index
      %26 = vector.load %arg4[%c0_13, %c0_14] : memref<32x128xf32, #tpu.memory_space<vmem>>, vector<32x128xf32>
      %27 = arith.mulf %26, %26 : vector<32x128xf32>
      %cst_15 = arith.constant dense<0.000000e+00> : vector<128xf32>
      %28 = vector.multi_reduction <add>, %27, %cst_15 [0] : vector<32x128xf32> to vector<128xf32>
      %29 = vector.shape_cast %28 : vector<128xf32> to vector<1x128xf32>
      %30 = math.rsqrt %29 : vector<1x128xf32>
      %c0_16 = arith.constant 0 : index
      %c0_17 = arith.constant 0 : index
      %31 = vector.load %arg10[%c0_16, %c0_17] : memref<1x128xf32, #tpu.memory_space<vmem>>, vector<1x128xf32>
      tpu.vector_store %arg10[%c0_16, %c0_17], %30 {strides = array<i32>} : memref<1x128xf32, #tpu.memory_space<vmem>>, vector<1x128xf32>,
    } else {
    }
    %c0 = arith.constant 0 : index
    %c0_1 = arith.constant 0 : index
    %3 = vector.load %arg3[%c0, %c0_1] : memref<16x32xf32, #tpu.memory_space<vmem>>, vector<16x32xf32>
    %c0_2 = arith.constant 0 : index
    %c0_3 = arith.constant 0 : index
    %4 = vector.load %arg4[%c0_2, %c0_3] : memref<32x128xf32, #tpu.memory_space<vmem>>, vector<32x128xf32>
    %cst = arith.constant dense<0.000000e+00> : vector<16x128xf32>
    %5 = tpu.matmul %3, %4, %cst {dimension_numbers = #tpu.dot_dimension_numbers<[1], [0], [0], [1], [0, 0, 1, 1], [], []>} : vector<16x32xf32>, vector<32x128xf32>, vector<16x128xf32> -> vector<16x128xf32>
    %c0_4 = arith.constant 0 : index
    %c0_5 = arith.constant 0 : index
    %6 = vector.load %arg5[%c0_4, %c0_5] : memref<16x1xf32, #tpu.memory_space<vmem>>, vector<16x1xf32>
    %7 = vector.broadcast %6 : vector<16x1xf32> to vector<16x128xf32>
    %8 = arith.mulf %5, %7 : vector<16x128xf32>
    %c0_6 = arith.constant 0 : index
    %c0_7 = arith.constant 0 : index
    %9 = vector.load %arg10[%c0_6, %c0_7] : memref<1x128xf32, #tpu.memory_space<vmem>>, vector<1x128xf32>
    %10 = vector.broadcast %9 : vector<1x128xf32> to vector<16x128xf32>
    %11 = arith.mulf %8, %10 : vector<16x128xf32>
    %cst_8 = arith.constant -1.000000e+00 : f32
    %cst_9 = arith.constant 1.000000e+00 : f32
    %12 = vector.broadcast %cst_8 : f32 to vector<16x128xf32>
    %13 = arith.maximumf %12, %11 : vector<16x128xf32>
    %14 = vector.broadcast %cst_9 : f32 to vector<16x128xf32>
    %15 = arith.minimumf %14, %13 : vector<16x128xf32>
    %c1_i32 = arith.constant 1 : i32
    %16 = arith.muli %arg0, %c1_i32 : i32
    %17 = arith.addi %16, %arg1 : i32
    %18 = arith.index_cast %17 : i32 to index
    %19 = memref.load %arg2[%18] : memref<2xi32, #tpu.memory_space<smem>>
    %c0_i32_10 = arith.constant 0 : i32
    %20 = arith.cmpi ne, %19, %c0_i32_10 : i32
    %21 = arith.extui %20 : i1 to i32
    %c0_i32_11 = arith.constant 0 : i32
    %22 = arith.cmpi ne, %21, %c0_i32_11 : i32
    scf.if %22 {
      %26 = arith.mulf %15, %15 : vector<16x128xf32>
      %cst_13 = arith.constant 1.000000e+00 : f32
      %27 = vector.broadcast %cst_13 : f32 to vector<16x128xf32>
      %28 = arith.subf %27, %26 : vector<16x128xf32>
      %cst_14 = arith.constant 0.000000e+00 : f32
      %29 = vector.broadcast %cst_14 : f32 to vector<16x128xf32>
      %30 = arith.maximumf %28, %29 : vector<16x128xf32>
      %31 = math.sqrt %30 : vector<16x128xf32>
      %c0_15 = arith.constant 0 : index
      %c0_16 = arith.constant 0 : index
      %32 = vector.load %arg6[%c0_15, %c0_16] : memref<16x1xi32, #tpu.memory_space<vmem>>, vector<16x1xi32>
      %33 = tpu.iota {dimensions = array<i32: 1>} : vector<16x128xi32>
      %c128_i32 = arith.constant 128 : i32
      %34 = arith.muli %arg0, %c128_i32 : i32
      %35 = vector.broadcast %34 : i32 to vector<16x128xi32>
      %36 = arith.addi %33, %35 : vector<16x128xi32>
      %37 = vector.broadcast %32 : vector<16x1xi32> to vector<16x128xi32>
      %38 = arith.cmpi eq, %36, %37 : vector<16x128xi32>
      %c-1_i32 = arith.constant -1 : i32
      %39 = vector.broadcast %c-1_i32 : i32 to vector<16x1xi32>
      %40 = arith.cmpi ne, %32, %39 : vector<16x1xi32>
      %41 = vector.broadcast %40 : vector<16x1xi1> to vector<16x128xi1>
      %42 = arith.andi %38, %41 : vector<16x128xi1>
      %c0_17 = arith.constant 0 : index
      %c0_18 = arith.constant 0 : index
      %43 = vector.load %arg7[%c0_17, %c0_18] : memref<16x1xf32, #tpu.memory_space<vmem>>, vector<16x1xf32>
      %44 = vector.broadcast %43 : vector<16x1xf32> to vector<16x128xf32>
      %45 = arith.mulf %15, %44 : vector<16x128xf32>
      %c0_19 = arith.constant 0 : index
      %c0_20 = arith.constant 0 : index
      %46 = vector.load %arg8[%c0_19, %c0_20] : memref<16x1xf32, #tpu.memory_space<vmem>>, vector<16x1xf32>
      %47 = vector.broadcast %46 : vector<16x1xf32> to vector<16x128xf32>
      %48 = arith.mulf %31, %47 : vector<16x128xf32>
      %49 = arith.subf %45, %48 : vector<16x128xf32>
      %50 = arith.select %42, %49, %15 : vector<16x128xi1>, vector<16x128xf32>
      %cst_21 = arith.constant 6.400000e+01 : f32
      %51 = vector.broadcast %cst_21 : f32 to vector<16x128xf32>
      %52 = arith.mulf %50, %51 : vector<16x128xf32>
      %c0_22 = arith.constant 0 : index
      %c0_23 = arith.constant 0 : index
      %53 = vector.load %arg9[%c0_22, %c0_23] : memref<16x128xf32, #tpu.memory_space<vmem>>, vector<16x128xf32>
      tpu.vector_store %arg9[%c0_22, %c0_23], %52 {strides = array<i32>} : memref<16x128xf32, #tpu.memory_space<vmem>>, vector<16x128xf32>,
    } else {
    }
    %true = arith.constant true
    %23 = arith.xori %20, %true : i1
    %24 = arith.extui %23 : i1 to i32
    %c0_i32_12 = arith.constant 0 : i32
    %25 = arith.cmpi ne, %24, %c0_i32_12 : i32
    scf.if %25 {
      %cst_13 = arith.constant 6.400000e+01 : f32
      %26 = vector.broadcast %cst_13 : f32 to vector<16x128xf32>
      %27 = arith.mulf %15, %26 : vector<16x128xf32>
      %c0_14 = arith.constant 0 : index
      %c0_15 = arith.constant 0 : index
      %28 = vector.load %arg9[%c0_14, %c0_15] : memref<16x128xf32, #tpu.memory_space<vmem>>, vector<16x128xf32>
      tpu.vector_store %arg9[%c0_14, %c0_15], %27 {strides = array<i32>} : memref<16x128xf32, #tpu.memory_space<vmem>>, vector<16x128xf32>,
    } else {
    }
    return
  }
  func.func @transform_0(%arg0: i32, %arg1: i32, %arg2: memref<2xi32, #tpu.memory_space<smem>>) -> (i32, i32) {
    %c0_i32 = arith.constant 0 : i32
    %c0_i32_0 = arith.constant 0 : i32
    return %arg1, %c0_i32 : i32, i32
  }
  func.func @transform_1(%arg0: i32, %arg1: i32, %arg2: memref<2xi32, #tpu.memory_space<smem>>) -> (i32, i32) {
    %c0_i32 = arith.constant 0 : i32
    %c0_i32_0 = arith.constant 0 : i32
    return %c0_i32, %arg0 : i32, i32
  }
  func.func @transform_2(%arg0: i32, %arg1: i32, %arg2: memref<2xi32, #tpu.memory_space<smem>>) -> (i32, i32) {
    %c0_i32 = arith.constant 0 : i32
    %c0_i32_0 = arith.constant 0 : i32
    return %arg1, %c0_i32 : i32, i32
  }
  func.func @transform_3(%arg0: i32, %arg1: i32, %arg2: memref<2xi32, #tpu.memory_space<smem>>) -> (i32, i32) {
    %c0_i32 = arith.constant 0 : i32
    %c0_i32_0 = arith.constant 0 : i32
    return %arg1, %c0_i32 : i32, i32
  }
  func.func @transform_4(%arg0: i32, %arg1: i32, %arg2: memref<2xi32, #tpu.memory_space<smem>>) -> (i32, i32) {
    %c0_i32 = arith.constant 0 : i32
    %c0_i32_0 = arith.constant 0 : i32
    return %arg1, %c0_i32 : i32, i32
  }
  func.func @transform_5(%arg0: i32, %arg1: i32, %arg2: memref<2xi32, #tpu.memory_space<smem>>) -> (i32, i32) {
    %c0_i32 = arith.constant 0 : i32
    %c0_i32_0 = arith.constant 0 : i32
    return %arg1, %c0_i32 : i32, i32
  }
  func.func @transform_6(%arg0: i32, %arg1: i32, %arg2: memref<2xi32, #tpu.memory_space<smem>>) -> (i32, i32) {
    %c0_i32 = arith.constant 0 : i32
    return %arg1, %arg0 : i32, i32
  }
}

</mosaic_0001>

<llo_original>
// kernel: tpu_custom_call.1
$region0: #{tpu_custom_call.1}
  #allocation0 [shape = 'u32[]', space=smem, size = 0x4, offset = 0x4, fixed_abs, tag = 'smem constant byte address 0x4 - core index']
  #allocation1 [shape = 'u32[144,128]{1,0:T(1,128)}', space=vmem, size = 0x12000, scoped, tag = 'internal scratch']
  #allocation2 [shape = 'f32[1,128]{1,0:T(1,128)}', space=vmem, size = 0x200, scoped, tag = 'scratch operand']
  #allocation3 [shape = 's32[1]{0}', space=sflag, size = 0x4, scoped, tag = 'scoped memory for tpu_custom_call.1']
  #allocation4 [shape = 'u8[512]{0}', space=smem, size = 0x200, scoped, tag = 'prefetched SMEM operand 0']
  %s0 = inlined_call_operand.vmem [shape: s32[2], index: 0, kind: input, shape index: {}]
  %s1 = inlined_call_operand.hbm [shape: f32[16,32], index: 1, kind: input, shape index: {}]
  %s2 = inlined_call_operand.vmem [shape: f32[32,256], index: 2, kind: input, shape index: {}]
  %s3 = inlined_call_operand.vmem [shape: f32[16,1], index: 3, kind: input, shape index: {}]
  %s4 = inlined_call_operand.vmem [shape: s32[16,1], index: 4, kind: input, shape index: {}]
  %s5 = inlined_call_operand.vmem [shape: f32[16,1], index: 5, kind: input, shape index: {}]
  %s6 = inlined_call_operand.vmem [shape: f32[16,1], index: 6, kind: input, shape index: {}]
  %s7 = inlined_call_operand.hbm [shape: f32[16,256], index: 7, kind: output, shape index: {}]
  %s8 = sld [smem:[#allocation0]]
  $region111: #{tpu_custom_call.1} parent=0
    _
  %s10 = ssub.s32 1, %s8
  %s11 = scalar_select 0, %s10, %s8
  %s12 = sshll.u32 %s0, 4
  %s13 = int_to_ptr.vmem [resolvable:$true] %s12
  %15 = dma.vmem_to_smem %s13, 16, [#allocation4], [#allocation3]
  %16 = dma.done [#allocation3], 16
  %17 = sfence
  $region1: #{tpu_custom_call.1} parent=0
    #allocation5 [shape = 'u8[8192]{0}', space=vmem, size = 0x2000, scoped, tag = 'input window, operand 1, single buffered']
    #allocation6 [shape = 's32[2]{0}', space=sflag, size = 0x8, scoped, tag = 'scoped memory for tpu_custom_call.1']
    #allocation7 [shape = 's32[2]{0}', space=sflag, size = 0x8, scoped, tag = 'scoped memory for tpu_custom_call.1']
    #allocation8 [shape = 'u8[32768]{0}', space=vmem, size = 0x8000, scoped, tag = 'input window, operand 2']
    #allocation9 [shape = 'u8[16384]{0}', space=vmem, size = 0x4000, scoped, tag = 'output window, operand 0']
    %18 = vsyncpa [#allocation6], 0
    %19 = vsyncpa [#allocation7], 0
    %s20 = scalar_lea.sflag [#allocation7], 1
    %21 = vsyncpa %s20, 0
    loop: start=0, step=1, limit=4
    $region2: #{tpu_custom_call.1} parent=1 // loop_pre_header
      _
    $region3: #{tpu_custom_call.1} parent=1 // loop_header
      %s23 = sphi 0, %s27
      %p24 = scmp.ge.s32.totalorder %s23, 4
      %s30 = sphi 0, %s42
      %s31 = sphi 0, %s38
      %s32 = sphi 0, %s30
      %s33 = sphi 0, %s31
      %s34 = sphi 0, %s32
      %s35 = sphi 0, %s33
      %s45 = sphi 0, %s47
      %s48 = sphi 0, %s45
      %s49 = sphi 0, %s48
      %s65 = sphi 0, %s49
      %s71 = sphi 0, %s73
      %s74 = sphi 0, %s71
      %s75 = sphi 0, %s74
      %s91 = sphi 0, %s75
      %s97 = sphi 0, %s99
      %s100 = sphi 0, %s97
      %s101 = sphi 0, %s100
      %s117 = sphi 0, %s101
      %s123 = sphi 0, %s125
      %s126 = sphi 0, %s123
      %s127 = sphi 0, %s126
      %s143 = sphi 0, %s127
      %s149 = sphi 0, %s151
      %s152 = sphi 0, %s149
      %s153 = sphi 0, %s152
      %s169 = sphi 0, %s153
      %s175 = sphi 0, %s177
      %s178 = sphi 0, %s175
      %s179 = sphi 0, %s178
      %s195 = sphi 0, %s179
      %s203 = sphi 0, %s205
      %s206 = sphi 0, %s203
      %s207 = sphi 0, %s206
      %s223 = sphi 0, %s207
    $region4: #{tpu_custom_call.1} parent=1 // loop_header_branch
      %26 = sbr.rel (%p24) target = $region8
    $region5: #{tpu_custom_call.1} parent=1 // loop_body
      %s28 = ssub.s32 %s23, 1
      %s29 = ssub.s32 %s23, 2
      %s36 = sadd.s32 1, %s31
      %p37 = scmp.ge.s32.totalorder %s36, 1
      %s38 = scalar_select %p37, 0, %s36
      %s39 = sadd.s32 1, %s30
      %s40 = scalar_select %p37, %s39, %s30
      %p41 = scmp.ge.s32.totalorder %s40, 2
      %s42 = scalar_select %p41, 0, %s40
      %s43 = ssub.s32 %s31, %s38
      %p44 = scmp.eq.s32.totalorder %s43, 0
      %s46 = sadd.s32 %s45, 1
      %s47 = scalar_select %p44, %s45, %s46
      %p50 = pneg %p44
      %p51 = scmp.eq.s32.totalorder %s23, 1
      %p52 = por %p50, %p51
      %p53 = scmp.ne.s32.totalorder %s45, %s48
      %p54 = scmp.eq.s32.totalorder %s23, 0
      %p55 = por %p53, %p54
      %p56 = scmp.ne.s32.totalorder %s45, %s48
      %p57 = scmp.eq.s32.totalorder %s28, 1
      %p58 = por %p56, %p57
      %p59 = scmp.ne.s32.totalorder %s48, %s49
      %p60 = scmp.eq.s32.totalorder %s28, 0
      %p61 = por %p59, %p60
      %p62 = scmp.ne.s32.totalorder %s48, %s49
      %p63 = scmp.eq.s32.totalorder %s29, 1
      %p64 = por %p62, %p63
      %p66 = scmp.ne.s32.totalorder %s49, %s65
      %p67 = scmp.eq.s32.totalorder %s29, 0
      %p68 = por %p66, %p67
      %s69 = ssub.s32 %s30, %s42
      %p70 = scmp.eq.s32.totalorder %s69, 0
      %s72 = sadd.s32 %s71, 1
      %s73 = scalar_select %p70, %s71, %s72
      %p76 = pneg %p70
      %p77 = scmp.eq.s32.totalorder %s23, 1
      %p78 = por %p76, %p77
      %p79 = scmp.ne.s32.totalorder %s71, %s74
      %p80 = scmp.eq.s32.totalorder %s23, 0
      %p81 = por %p79, %p80
      %p82 = scmp.ne.s32.totalorder %s71, %s74
      %p83 = scmp.eq.s32.totalorder %s28, 1
      %p84 = por %p82, %p83
      %p85 = scmp.ne.s32.totalorder %s74, %s75
      %p86 = scmp.eq.s32.totalorder %s28, 0
      %p87 = por %p85, %p86
      %p88 = scmp.ne.s32.totalorder %s74, %s75
      %p89 = scmp.eq.s32.totalorder %s29, 1
      %p90 = por %p88, %p89
      %p92 = scmp.ne.s32.totalorder %s75, %s91
      %p93 = scmp.eq.s32.totalorder %s29, 0
      %p94 = por %p92, %p93
      %s95 = ssub.s32 %s31, %s38
      %p96 = scmp.eq.s32.totalorder %s95, 0
      %s98 = sadd.s32 %s97, 1
      %s99 = scalar_select %p96, %s97, %s98
      %p102 = pneg %p96
      %p103 = scmp.eq.s32.totalorder %s23, 1
      %p104 = por %p102, %p103
      %p105 = scmp.ne.s32.totalorder %s97, %s100
      %p106 = scmp.eq.s32.totalorder %s23, 0
      %p107 = por %p105, %p106
      %p108 = scmp.ne.s32.totalorder %s97, %s100
      %p109 = scmp.eq.s32.totalorder %s28, 1
      %p110 = por %p108, %p109
      %p111 = scmp.ne.s32.totalorder %s100, %s101
      %p112 = scmp.eq.s32.totalorder %s28, 0
      %p113 = por %p111, %p112
      %p114 = scmp.ne.s32.totalorder %s100, %s101
      %p115 = scmp.eq.s32.totalorder %s29, 1
      %p116 = por %p114, %p115
      %p118 = scmp.ne.s32.totalorder %s101, %s117
      %p119 = scmp.eq.s32.totalorder %s29, 0
      %p120 = por %p118, %p119
      %s121 = ssub.s32 %s31, %s38
      %p122 = scmp.eq.s32.totalorder %s121, 0
      %s124 = sadd.s32 %s123, 1
      %s125 = scalar_select %p122, %s123, %s124
      %p128 = pneg %p122
      %p129 = scmp.eq.s32.totalorder %s23, 1
      %p130 = por %p128, %p129
      %p131 = scmp.ne.s32.totalorder %s123, %s126
      %p132 = scmp.eq.s32.totalorder %s23, 0
      %p133 = por %p131, %p132
      %p134 = scmp.ne.s32.totalorder %s123, %s126
      %p135 = scmp.eq.s32.totalorder %s28, 1
      %p136 = por %p134, %p135
      %p137 = scmp.ne.s32.totalorder %s126, %s127
      %p138 = scmp.eq.s32.totalorder %s28, 0
      %p139 = por %p137, %p138
      %p140 = scmp.ne.s32.totalorder %s126, %s127
      %p141 = scmp.eq.s32.totalorder %s29, 1
      %p142 = por %p140, %p141
      %p144 = scmp.ne.s32.totalorder %s127, %s143
      %p145 = scmp.eq.s32.totalorder %s29, 0
      %p146 = por %p144, %p145
      %s147 = ssub.s32 %s31, %s38
      %p148 = scmp.eq.s32.totalorder %s147, 0
      %s150 = sadd.s32 %s149, 1
      %s151 = scalar_select %p148, %s149, %s150
      %p154 = pneg %p148
      %p155 = scmp.eq.s32.totalorder %s23, 1
      %p156 = por %p154, %p155
      %p157 = scmp.ne.s32.totalorder %s149, %s152
      %p158 = scmp.eq.s32.totalorder %s23, 0
      %p159 = por %p157, %p158
      %p160 = scmp.ne.s32.totalorder %s149, %s152
      %p161 = scmp.eq.s32.totalorder %s28, 1
      %p162 = por %p160, %p161
      %p163 = scmp.ne.s32.totalorder %s152, %s153
      %p164 = scmp.eq.s32.totalorder %s28, 0
      %p165 = por %p163, %p164
      %p166 = scmp.ne.s32.totalorder %s152, %s153
      %p167 = scmp.eq.s32.totalorder %s29, 1
      %p168 = por %p166, %p167
      %p170 = scmp.ne.s32.totalorder %s153, %s169
      %p171 = scmp.eq.s32.totalorder %s29, 0
      %p172 = por %p170, %p171
      %s173 = ssub.s32 %s31, %s38
      %p174 = scmp.eq.s32.totalorder %s173, 0
      %s176 = sadd.s32 %s175, 1
      %s177 = scalar_select %p174, %s175, %s176
      %p180 = pneg %p174
      %p181 = scmp.eq.s32.totalorder %s23, 1
      %p182 = por %p180, %p181
      %p183 = scmp.ne.s32.totalorder %s175, %s178
      %p184 = scmp.eq.s32.totalorder %s23, 0
      %p185 = por %p183, %p184
      %p186 = scmp.ne.s32.totalorder %s175, %s178
      %p187 = scmp.eq.s32.totalorder %s28, 1
      %p188 = por %p186, %p187
      %p189 = scmp.ne.s32.totalorder %s178, %s179
      %p190 = scmp.eq.s32.totalorder %s28, 0
      %p191 = por %p189, %p190
      %p192 = scmp.ne.s32.totalorder %s178, %s179
      %p193 = scmp.eq.s32.totalorder %s29, 1
      %p194 = por %p192, %p193
      %p196 = scmp.ne.s32.totalorder %s179, %s195
      %p197 = scmp.eq.s32.totalorder %s29, 0
      %p198 = por %p196, %p197
      %s199 = ssub.s32 %s31, %s38
      %s200 = ssub.s32 %s30, %s42
      %s201 = sor.u32 %s199, %s200
      %p202 = scmp.eq.s32.totalorder %s201, 0
      %s204 = sadd.s32 %s203, 1
      %s205 = scalar_select %p202, %s203, %s204
      %p208 = pneg %p202
      %p209 = scmp.eq.s32.totalorder %s23, 1
      %p210 = por %p208, %p209
      %p211 = scmp.ne.s32.totalorder %s203, %s206
      %p212 = scmp.eq.s32.totalorder %s23, 0
      %p213 = por %p211, %p212
      %p214 = scmp.ne.s32.totalorder %s203, %s206
      %p215 = scmp.eq.s32.totalorder %s28, 1
      %p216 = por %p214, %p215
      %p217 = scmp.ne.s32.totalorder %s206, %s207
      %p218 = scmp.eq.s32.totalorder %s28, 0
      %p219 = por %p217, %p218
      %p220 = scmp.ne.s32.totalorder %s206, %s207
      %p221 = scmp.eq.s32.totalorder %s29, 1
      %p222 = por %p220, %p221
      %p224 = scmp.ne.s32.totalorder %s207, %s223
      %p225 = scmp.eq.s32.totalorder %s29, 0
      %p226 = por %p224, %p225
      %p227 = scmp.le.s32.totalorder 1, %s23
      %p228 = scmp.lt.s32.totalorder %s23, 3
      %p229 = pnand %p227, %p228
      %p230 = pneg %p229
      // Predicated region
      $region9: #{tpu_custom_call.1} parent=5 // pred_check
        _
      $region10: #{tpu_custom_call.1} parent=5 // pred_check_branch
        %232 = sbr.rel (%p229) target = $region12
      $region11: #{tpu_custom_call.1} parent=5 // pred_region
        %s233 = ssub.s32 %s23, 1
        // Predicated region
        $region13: #{tpu_custom_call.1} parent=11 // pred_check
          %p234 = pneg %p61
        $region14: #{tpu_custom_call.1} parent=11 // pred_check_branch
          %236 = sbr.rel (%p234) target = $region16
        $region15: #{tpu_custom_call.1} parent=11 // pred_region
          %s237 = smul.u32 2, %s33
          %s239 = ssub.s32 256, 256
          %240 = vsyncadd [#allocation6], %s239
          %s241 = smul.addr %s237, 128
          %s242 = scalar_lea.hbm %s1, %s241
          %s243 = sshll.u32 [#allocation5], 4
          %s244 = int_to_ptr.vmem [resolvable:$true] %s243
          %249 = dma.hbm_to_vmem [thread:$0]  %s242, 256, %s244, [#allocation6], 128, 128, 8
        $region16: #{tpu_custom_call.1} parent=11 // pred_fallthru
          _
        // Predicated region
        $region17: #{tpu_custom_call.1} parent=11 // pred_check
          %p250 = pneg %p113
        $region18: #{tpu_custom_call.1} parent=11 // pred_check_branch
          %252 = sbr.rel (%p250) target = $region20
        $region19: #{tpu_custom_call.1} parent=11 // pred_region
          %s253 = smul.u32 2, %s33
          %p254 = scmp.lt.s32.totalorder %s253, 1
          %s255 = scalar_select %p254, %s253, 1
          %s256 = smul.addr %s255, 8
          %s257 = scalar_lea.vmem %s3, %s256
          %s258 = smul.u32 2, %s33
        $region20: #{tpu_custom_call.1} parent=11 // pred_fallthru
          _
        // Predicated region
        $region21: #{tpu_custom_call.1} parent=11 // pred_check
          %p259 = pneg %p139
        $region22: #{tpu_custom_call.1} parent=11 // pred_check_branch
          %261 = sbr.rel (%p259) target = $region24
        $region23: #{tpu_custom_call.1} parent=11 // pred_region
          %s262 = smul.u32 2, %s33
          %p263 = scmp.lt.s32.totalorder %s262, 1
          %s264 = scalar_select %p263, %s262, 1
          %s265 = smul.addr %s264, 8
          %s266 = scalar_lea.vmem %s4, %s265
          %s267 = smul.u32 2, %s33
        $region24: #{tpu_custom_call.1} parent=11 // pred_fallthru
          _
        // Predicated region
        $region25: #{tpu_custom_call.1} parent=11 // pred_check
          %p268 = pneg %p165
        $region26: #{tpu_custom_call.1} parent=11 // pred_check_branch
          %270 = sbr.rel (%p268) target = $region28
        $region27: #{tpu_custom_call.1} parent=11 // pred_region
          %s271 = smul.u32 2, %s33
          %p272 = scmp.lt.s32.totalorder %s271, 1
          %s273 = scalar_select %p272, %s271, 1
          %s274 = smul.addr %s273, 8
          %s275 = scalar_lea.vmem %s5, %s274
          %s276 = smul.u32 2, %s33
        $region28: #{tpu_custom_call.1} parent=11 // pred_fallthru
          _
        // Predicated region
        $region29: #{tpu_custom_call.1} parent=11 // pred_check
          %p277 = pneg %p191
        $region30: #{tpu_custom_call.1} parent=11 // pred_check_branch
          %279 = sbr.rel (%p277) target = $region32
        $region31: #{tpu_custom_call.1} parent=11 // pred_region
          %s280 = smul.u32 2, %s33
          %p281 = scmp.lt.s32.totalorder %s280, 1
          %s282 = scalar_select %p281, %s280, 1
          %s283 = smul.addr %s282, 8
          %s284 = scalar_lea.vmem %s6, %s283
          %s285 = smul.u32 2, %s33
        $region32: #{tpu_custom_call.1} parent=11 // pred_fallthru
          _
      $region12: #{tpu_custom_call.1} parent=5 // pred_fallthru
        _
      %p286 = scmp.lt.s32.totalorder %s23, 2
      // Predicated region
      $region33: #{tpu_custom_call.1} parent=5 // pred_check
        %p287 = pneg %p286
      $region34: #{tpu_custom_call.1} parent=5 // pred_check_branch
        %289 = sbr.rel (%p287) target = $region36
      $region35: #{tpu_custom_call.1} parent=5 // pred_region
        // Predicated region
        $region37: #{tpu_custom_call.1} parent=35 // pred_check
          %p290 = pneg %p81
        $region38: #{tpu_custom_call.1} parent=35 // pred_check_branch
          %292 = sbr.rel (%p290) target = $region40
        $region39: #{tpu_custom_call.1} parent=35 // pred_region
          %s293 = sand.u32 %s71, 1
          %s294 = sand.u32 %s71, 1
          %s295 = smul.addr %s294, 32
          %s296 = scalar_lea.vmem [#allocation8], %s295
          %s297 = smul.addr %s30, 8
          %s298 = scalar_lea.vmem %s2, %s297
          // Predicated region
          $region41: #{tpu_custom_call.1} parent=39 // pred_check
            _
          $region42: #{tpu_custom_call.1} parent=39 // pred_check_branch
            %300 = sbr.rel (0) target = $region44
          $region43: #{tpu_custom_call.1} parent=39 // pred_region
            // Predicated region
            $region45: #{tpu_custom_call.1} parent=43 // pred_check
              _
            $region46: #{tpu_custom_call.1} parent=43 // pred_check_branch
              %302 = sbr.rel (0) target = $region48
            $region47: #{tpu_custom_call.1} parent=43 // pred_region
              // Predicated region
              $region60: #{tpu_custom_call.1} parent=47 // pred_check
                _
              $region61: #{tpu_custom_call.1} parent=47 // pred_check_branch
                %324 = sbr.rel (0) target = $region63
              $region62: #{tpu_custom_call.1} parent=47 // pred_region
                loop: start=0, step=1, limit=1
                $region64: #{tpu_custom_call.1} parent=62 // loop_pre_header
                  _
                $region65: #{tpu_custom_call.1} parent=62 // loop_header
                  %s326 = sphi 0, %s330
                  %p327 = scmp.ge.s32.totalorder %s326, 1
                  %s331 = sphi %s298, %s298
                  %s332 = sphi %s296, %s296
                $region66: #{tpu_custom_call.1} parent=62 // loop_header_branch
                  %329 = sbr.rel (%p327) target = $region70
                $region67: #{tpu_custom_call.1} parent=62 // loop_body
                  %v333 = vld [vmem:[%s331] sm:$0xff]
                  %334 = vst [vmem:[%s332] sm:$0xff] %v333
                  %v335 = vld [vmem:[%s331 + $0x10] sm:$0xff]
                  %336 = vst [vmem:[%s332 + $0x8] sm:$0xff] %v335
                  %v337 = vld [vmem:[%s331 + $0x20] sm:$0xff]
                  %338 = vst [vmem:[%s332 + $0x10] sm:$0xff] %v337
                  %v339 = vld [vmem:[%s331 + $0x30] sm:$0xff]
                  %340 = vst [vmem:[%s332 + $0x18] sm:$0xff] %v339
                $region68: #{tpu_custom_call.1} parent=62 // loop_footer
                  %s330 = sadd.s32 1, %s326
                $region69: #{tpu_custom_call.1} parent=62 // loop_footer_branch
                  %325 = sbr.rel target = $region65
                $region70: #{tpu_custom_call.1} parent=62 // loop_exit
                  _
              $region63: #{tpu_custom_call.1} parent=47 // pred_fallthru
                _
              // Predicated region
              $region71: #{tpu_custom_call.1} parent=47 // pred_check
                _
              $region72: #{tpu_custom_call.1} parent=47 // pred_check_branch
                %342 = sbr.rel target = $region74
              $region73: #{tpu_custom_call.1} parent=47 // pred_region
                _
              $region74: #{tpu_custom_call.1} parent=47 // pred_fallthru
                _
            $region48: #{tpu_custom_call.1} parent=43 // pred_fallthru
              _
            // Predicated region
            $region49: #{tpu_custom_call.1} parent=43 // pred_check
              _
            $region50: #{tpu_custom_call.1} parent=43 // pred_check_branch
              %304 = sbr.rel target = $region52
            $region51: #{tpu_custom_call.1} parent=43 // pred_region
              %s306 = ssub.s32 256, 1
              loop: start=0, step=1, limit=1
              $region53: #{tpu_custom_call.1} parent=51 // loop_pre_header
                _
              $region54: #{tpu_custom_call.1} parent=51 // loop_header
                %s308 = sphi 0, %s312
                %p309 = scmp.ge.s32.totalorder %s308, 1
                %s313 = sphi %s298, %s298
                %s314 = sphi %s296, %s296
              $region55: #{tpu_custom_call.1} parent=51 // loop_header_branch
                %311 = sbr.rel (%p309) target = $region59
              $region56: #{tpu_custom_call.1} parent=51 // loop_body
                %v315 = vld [vmem:[%s313] sm:%s306]
                %316 = vst [vmem:[%s314] sm:%s306] %v315
                %v317 = vld [vmem:[%s313 + $0x10] sm:%s306]
                %318 = vst [vmem:[%s314 + $0x8] sm:%s306] %v317
                %v319 = vld [vmem:[%s313 + $0x20] sm:%s306]
                %320 = vst [vmem:[%s314 + $0x10] sm:%s306] %v319
                %v321 = vld [vmem:[%s313 + $0x30] sm:%s306]
                %322 = vst [vmem:[%s314 + $0x18] sm:%s306] %v321
              $region57: #{tpu_custom_call.1} parent=51 // loop_footer
                %s312 = sadd.s32 1, %s308
              $region58: #{tpu_custom_call.1} parent=51 // loop_footer_branch
                %307 = sbr.rel target = $region54
              $region59: #{tpu_custom_call.1} parent=51 // loop_exit
                _
            $region52: #{tpu_custom_call.1} parent=43 // pred_fallthru
              _
          $region44: #{tpu_custom_call.1} parent=39 // pred_fallthru
            _
          %343 = vnop
        $region40: #{tpu_custom_call.1} parent=35 // pred_fallthru
          _
      $region36: #{tpu_custom_call.1} parent=5 // pred_fallthru
        _
      %p344 = scmp.le.s32.totalorder 1, %s23
      %p345 = scmp.lt.s32.totalorder %s23, 3
      %p346 = pnand %p344, %p345
      %p347 = pneg %p346
      // Predicated region
      $region75: #{tpu_custom_call.1} parent=5 // pred_check
        _
      $region76: #{tpu_custom_call.1} parent=5 // pred_check_branch
        %349 = sbr.rel (%p346) target = $region78
      $region77: #{tpu_custom_call.1} parent=5 // pred_region
        %s350 = ssub.s32 %s23, 1
        // Predicated region
        $region79: #{tpu_custom_call.1} parent=77 // pred_check
          %p351 = pneg %p61
        $region80: #{tpu_custom_call.1} parent=77 // pred_check_branch
          %353 = sbr.rel (%p351) target = $region82
        $region81: #{tpu_custom_call.1} parent=77 // pred_region
          %354 = dma.done [#allocation6], 256
        $region82: #{tpu_custom_call.1} parent=77 // pred_fallthru
          _
        %s355 = sand.u32 %s74, 1
        %s356 = sand.u32 %s74, 1
        %s357 = smul.addr %s356, 32
        %s358 = scalar_lea.vmem [#allocation8], %s357
        // Predicated region
        $region83: #{tpu_custom_call.1} parent=77 // pred_check
          %p359 = pneg %p87
        $region84: #{tpu_custom_call.1} parent=77 // pred_check_branch
          %361 = sbr.rel (%p359) target = $region86
        $region85: #{tpu_custom_call.1} parent=77 // pred_region
          _
        $region86: #{tpu_custom_call.1} parent=77 // pred_fallthru
          _
        %p362 = pneg %p61
        %p363 = pneg %p58
        %s364 = sand.u32 %s74, 1
        %s365 = sand.u32 %s74, 1
        %s366 = smul.addr %s365, 32
        %s367 = scalar_lea.vmem [#allocation8], %s366
        %p368 = pneg %p87
        %p369 = pneg %p84
        %s370 = smul.u32 2, %s33
        %p371 = scmp.lt.s32.totalorder %s370, 1
        %s372 = scalar_select %p371, %s370, 1
        %s373 = smul.addr %s372, 8
        %s374 = scalar_lea.vmem %s3, %s373
        %p375 = pneg %p113
        %p376 = pneg %p110
        %s377 = smul.u32 2, %s33
        %p378 = scmp.lt.s32.totalorder %s377, 1
        %s379 = scalar_select %p378, %s377, 1
        %s380 = smul.addr %s379, 8
        %s381 = scalar_lea.vmem %s4, %s380
        %p382 = pneg %p139
        %p383 = pneg %p136
        %s384 = smul.u32 2, %s33
        %p385 = scmp.lt.s32.totalorder %s384, 1
        %s386 = scalar_select %p385, %s384, 1
        %s387 = smul.addr %s386, 8
        %s388 = scalar_lea.vmem %s5, %s387
        %p389 = pneg %p165
        %p390 = pneg %p162
        %s391 = smul.u32 2, %s33
        %p392 = scmp.lt.s32.totalorder %s391, 1
        %s393 = scalar_select %p392, %s391, 1
        %s394 = smul.addr %s393, 8
        %s395 = scalar_lea.vmem %s6, %s394
        %p396 = pneg %p191
        %p397 = pneg %p188
        %p398 = pneg %p219
        %p399 = pneg %p216
        %s400 = sand.u32 %s206, 1
        %s401 = scalar_lea.sflag [#allocation7], %s400
        %s402 = sand.u32 %s206, 1
        %s403 = smul.addr %s402, 16
        %s404 = scalar_lea.vmem [#allocation9], %s403
        %s405 = smul.u32 2, %s33
        %s406 = smul.u32 2, %s33
        %p407 = scmp.lt.s32.totalorder %s406, 1
        %s408 = scalar_select %p407, %s406, 1
        %s409 = smul.addr %s408, 8
        %s410 = scalar_lea.vmem %s3, %s409
        %s411 = smul.u32 2, %s33
        %s412 = smul.u32 2, %s33
        %p413 = scmp.lt.s32.totalorder %s412, 1
        %s414 = scalar_select %p413, %s412, 1
        %s415 = smul.addr %s414, 8
        %s416 = scalar_lea.vmem %s4, %s415
        %s417 = smul.u32 2, %s33
        %s418 = smul.u32 2, %s33
        %p419 = scmp.lt.s32.totalorder %s418, 1
        %s420 = scalar_select %p419, %s418, 1
        %s421 = smul.addr %s420, 8
        %s422 = scalar_lea.vmem %s5, %s421
        %s423 = smul.u32 2, %s33
        %s424 = smul.u32 2, %s33
        %p425 = scmp.lt.s32.totalorder %s424, 1
        %s426 = scalar_select %p425, %s424, 1
        %s427 = smul.addr %s426, 8
        %s428 = scalar_lea.vmem %s6, %s427
        %s429 = smul.u32 2, %s33
        %s430 = smul.u32 2, %s33
        %p431 = scmp.eq.s32.totalorder %s33, 0
        // Predicated region
        $region87: #{tpu_custom_call.1} parent=77 // pred_check
          %p432 = pneg %p431
        $region88: #{tpu_custom_call.1} parent=77 // pred_check_branch
          %434 = sbr.rel (%p432) target = $region90
        $region89: #{tpu_custom_call.1} parent=77 // pred_region
          %v435 = vld [vmem:[%s358] sm:$0xff]
          %v436 = vld [vmem:[%s358 + $0x8] sm:$0xff]
          %v437 = vld [vmem:[%s358 + $0x10] sm:$0xff]
          %v438 = vld [vmem:[%s358 + $0x18] sm:$0xff]
          %v439 = vmul.f32 %v435, %v435
          %v440 = vmul.f32 %v436, %v436
          %v441 = vmul.f32 %v437, %v437
          %v442 = vmul.f32 %v438, %v438
          %v443 = vadd.f32 %v439, %v440
          %v444 = vadd.f32 %v443, %v441
          %v445 = vadd.f32 %v444, %v442
          %v446 = vrot.slane %v445, 4
          %v447 = vadd.f32 %v445, %v446
          %v448 = vrot.slane %v447, 2
          %v449 = vadd.f32 %v447, %v448
          %v450 = vrot.slane %v449, 1
          %v451 = vadd.f32 %v449, %v450
          %v452 = vrsqrt.pop %v451
          %453 = vst [vmem:[#allocation2] sm:$0x1] %v452
        $region90: #{tpu_custom_call.1} parent=77 // pred_fallthru
          _
        %v454 = vld [vmem:[#allocation5] sm:$0xff]
        %v455 = vld [vmem:[#allocation5 + $0x8] sm:$0xff]
        %v456 = vld [vmem:[%s358] sm:$0xff]
        %v457 = vld [vmem:[%s358 + $0x8] sm:$0xff]
        %v458 = vld [vmem:[%s358 + $0x10] sm:$0xff]
        %v459 = vld [vmem:[%s358 + $0x18] sm:$0xff]
        %vm460 = vcmask 261120
        %v462 = vsel %vm460, %v454, 0
        %v465 = vsel %vm460, %v455, 0
        %467 = vmatprep.subr.mxu0 0.0
        %468 = vmatpush1.msra.mxu0 0.0
        %469 = vmatprep.subr.mxu0 0.0
        %470 = vmatpush1.msra.mxu0 0.0
        %471 = vmatprep.subr.mxu0 0.0
        %472 = vmatpush1.msra.mxu0 0.0
        %473 = vmatprep.subr.mxu0 0.0
        %474 = vmatpush1.msra.mxu0 0.0
        %475 = vmatprep.subr.mxu0 0.0
        %476 = vmatpush1.msra.mxu0 0.0
        %477 = vmatprep.subr.mxu0 0.0
        %478 = vmatpush1.msra.mxu0 0.0
        %479 = vmatprep.subr.mxu0 0.0
        %480 = vmatpush1.msra.mxu0 0.0
        %481 = vmatprep.subr.mxu0 0.0
        %482 = vmatpush1.msra.mxu0 0.0
        %483 = vmatprep.subr.mxu0 0.0
        %484 = vmatpush1.msra.mxu0 0.0
        %485 = vmatprep.subr.mxu0 0.0
        %486 = vmatpush1.msra.mxu0 0.0
        %487 = vmatprep.subr.mxu0 0.0
        %488 = vmatpush1.msra.mxu0 0.0
        %489 = vmatprep.subr.mxu0 0.0
        %490 = vmatpush1.msra.mxu0 0.0
        %491 = vmatprep.subr.mxu0 0.0
        %492 = vmatpush1.msra.mxu0 %v459
        %493 = vmatprep.subr.mxu0 0.0
        %494 = vmatpush1.msra.mxu0 %v458
        %495 = vmatprep.subr.mxu0 0.0
        %496 = vmatpush1.msra.mxu0 %v457
        %497 = vmatprep.subr.mxu0 0.0
        %498 = vmatpush1.msra.mxu0 %v456
        %499 = vmatprep.subr.mxu0 0.0
        %500 = vmatpush2.msra.mxu0 0.0
        %501 = vmatprep.subr.mxu0 0.0
        %502 = vmatpush2.msra.mxu0 0.0
        %503 = vmatprep.subr.mxu0 0.0
        %504 = vmatpush2.msra.mxu0 0.0
        %505 = vmatprep.subr.mxu0 0.0
        %506 = vmatpush2.msra.mxu0 0.0
        %507 = vmatprep.subr.mxu0 0.0
        %508 = vmatpush2.msra.mxu0 0.0
        %509 = vmatprep.subr.mxu0 0.0
        %510 = vmatpush2.msra.mxu0 0.0
        %511 = vmatprep.subr.mxu0 0.0
        %512 = vmatpush2.msra.mxu0 0.0
        %513 = vmatprep.subr.mxu0 0.0
        %514 = vmatpush2.msra.mxu0 0.0
        %515 = vmatprep.subr.mxu0 0.0
        %516 = vmatpush2.msra.mxu0 0.0
        %517 = vmatprep.subr.mxu0 0.0
        %518 = vmatpush2.msra.mxu0 0.0
        %519 = vmatprep.subr.mxu0 0.0
        %520 = vmatpush2.msra.mxu0 0.0
        %521 = vmatprep.subr.mxu0 0.0
        %522 = vmatpush2.msra.mxu0 0.0
        %523 = vmatprep.subr.mxu0 0.0
        %524 = vmatpush2.msra.mxu0 0.0
        %525 = vmatprep.subr.mxu0 0.0
        %526 = vmatpush2.msra.mxu0 0.0
        %527 = vmatprep.subr.mxu0 0.0
        %528 = vmatpush2.msra.mxu0 0.0
        %529 = vmatprep.subr.mxu0 0.0
        %530 = vmatpush2.msra.mxu0 0.0
        %531 = vmatprep.mubr.f32.mxu0 0.0
        %532 = vmatmul.mubr.f32.gmra.mxu0 %v462
        %v533 = vpop.f32.mrf.mxu0
        %v534 = vadd.f32 0.0, %v533
        %v535 = vpop.f32.mrf.mxu0
        %536 = vmatprep.mubr.f32.mxu0 0.0
        %537 = vmatmul.mubr.f32.gmra.mxu0 %v465
        %v538 = vpop.f32.mrf.mxu0
        %v539 = vadd.f32 0.0, %v538
        %v540 = vpop.f32.mrf.mxu0
        %541 = vdwg.mxu0
        %v542 = vld [vmem:[%s410] sm:$0xff]
        %v543 = vld [vmem:[%s410 + $0x8] sm:$0xff]
        %545 = vset.pattern.permute.xlu0 0
        %546 = vperm.xlu0 %545, %v542
        %v547 = vpop.permute.xlu0 %546
        %550 = vset.pattern.permute.xlu0 0
        %551 = vperm.xlu0 %550, %v543
        %v552 = vpop.permute.xlu0 %551
        %v554 = vmul.f32 %v534, %v547
        %v555 = vmul.f32 %v539, %v552
        %v556 = vld [vmem:[#allocation2] sm:$0x1]
        %v558 = vlaneseq
        %v559 = vshrl.u32 %v558, 7
        %v560 = vsub.s32 0, %v559
        %v561 = vrot.slane %v556, %v560
        %v563 = vmul.f32 %v554, %v561
        %v564 = vmul.f32 %v555, %v561
        %v565 = vmax.f32 %v563, -1.0
        %v566 = vmax.f32 %v564, -1.0
        %v567 = vmin.f32 %v565, 1.0
        %v568 = vmin.f32 %v566, 1.0
        %s569 = sadd.s32 %s32, %s33
        %s570 = sld [smem:[#allocation4 + %s569]]
        %p571 = scmp.ne.s32.totalorder %s570, 0
        // Predicated region
        $region91: #{tpu_custom_call.1} parent=77 // pred_check
          %p572 = pneg %p571
        $region92: #{tpu_custom_call.1} parent=77 // pred_check_branch
          %574 = sbr.rel (%p572) target = $region94
        $region93: #{tpu_custom_call.1} parent=77 // pred_region
          %v575 = vmul.f32 %v567, %v567
          %v576 = vmul.f32 %v568, %v568
          %v577 = vsub.f32 1.0, %v575
          %v578 = vsub.f32 1.0, %v576
          %v579 = vmax.f32 %v577, 0.0
          %v580 = vmax.f32 %v578, 0.0
          %v581 = vrsqrt.pop %v579
          %v582 = vmul.f32 %v579, %v581
          %vm583 = vcmp.eq.f32.partialorder %v579, inf
          %v584 = vsel %vm583, %v579, %v582
          %vm585 = vcmp.eq.f32.partialorder %v579, 0.0
          %v586 = vand.u32 %v579, 2147483648
          %v587 = vsel %vm585, %v586, %v584
          %v588 = vrsqrt.pop %v580
          %v589 = vmul.f32 %v580, %v588
          %vm590 = vcmp.eq.f32.partialorder %v580, inf
          %v591 = vsel %vm590, %v580, %v589
          %vm592 = vcmp.eq.f32.partialorder %v580, 0.0
          %v593 = vand.u32 %v580, 2147483648
          %v594 = vsel %vm592, %v593, %v591
          %v595 = vld [vmem:[%s416] sm:$0xff]
          %v596 = vld [vmem:[%s416 + $0x8] sm:$0xff]
          %v597 = vlaneseq
          %v598 = vand.u32 %v597, 127
          %s599 = smul.u32 %s32, 128
          %v600 = vstv %s599
          %v601 = vadd.s32 %v598, %v600
          %602 = vset.pattern.permute.xlu0 0
          %603 = vperm.xlu0 %602, %v595
          %v604 = vpop.permute.xlu0 %603
          %605 = vset.pattern.permute.xlu0 0
          %606 = vperm.xlu0 %605, %v596
          %v607 = vpop.permute.xlu0 %606
          %vm608 = vcmp.eq.s32.totalorder %v601, %v604
          %vm609 = vcmp.eq.s32.totalorder %v601, %v607
          %vm610 = vcmp.ne.s32.totalorder %v595, 4294967295
          %vm611 = vcmp.ne.s32.totalorder %v596, 4294967295
          %v612 = vsel %vm610, 1, 0
          %v613 = vsel %vm611, 1, 0
          %614 = vset.pattern.permute.xlu0 0
          %615 = vperm.xlu0 %614, %v612
          %v616 = vpop.permute.xlu0 %615
          %617 = vset.pattern.permute.xlu0 0
          %618 = vperm.xlu0 %617, %v613
          %v619 = vpop.permute.xlu0 %618
          %vm620 = vcmp.eq.s32.totalorder %v616, 1
          %vm621 = vcmp.eq.s32.totalorder %v619, 1
          %vm622 = vmand %vm608, %vm620
          %vm623 = vmand %vm609, %vm621
          %v624 = vld [vmem:[%s422] sm:$0xff]
          %v625 = vld [vmem:[%s422 + $0x8] sm:$0xff]
          %627 = vset.pattern.permute.xlu0 0
          %628 = vperm.xlu0 %627, %v624
          %v629 = vpop.permute.xlu0 %628
          %632 = vset.pattern.permute.xlu0 0
          %633 = vperm.xlu0 %632, %v625
          %v634 = vpop.permute.xlu0 %633
          %v636 = vmul.f32 %v567, %v629
          %v637 = vmul.f32 %v568, %v634
          %v638 = vld [vmem:[%s428] sm:$0xff]
          %v639 = vld [vmem:[%s428 + $0x8] sm:$0xff]
          %641 = vset.pattern.permute.xlu0 0
          %642 = vperm.xlu0 %641, %v638
          %v643 = vpop.permute.xlu0 %642
          %646 = vset.pattern.permute.xlu0 0
          %647 = vperm.xlu0 %646, %v639
          %v648 = vpop.permute.xlu0 %647
          %v650 = vmul.f32 %v587, %v643
          %v651 = vmul.f32 %v594, %v648
          %v652 = vsub.f32 %v636, %v650
          %v653 = vsub.f32 %v637, %v651
          %v654 = vsel %vm622, %v652, %v567
          %v655 = vsel %vm623, %v653, %v568
          %v656 = vmul.f32 %v654, 64.0
          %v657 = vmul.f32 %v655, 64.0
          %658 = vst [vmem:[%s404] sm:$0xff] %v656
          %659 = vst [vmem:[%s404 + $0x8] sm:$0xff] %v657
        $region94: #{tpu_custom_call.1} parent=77 // pred_fallthru
          _
        %p660 = scmp.eq.s32.totalorder %s570, 0
        // Predicated region
        $region95: #{tpu_custom_call.1} parent=77 // pred_check
          %p661 = pneg %p660
        $region96: #{tpu_custom_call.1} parent=77 // pred_check_branch
          %663 = sbr.rel (%p661) target = $region98
        $region97: #{tpu_custom_call.1} parent=77 // pred_region
          %v664 = vmul.f32 %v567, 64.0
          %v665 = vmul.f32 %v568, 64.0
          %666 = vst [vmem:[%s404] sm:$0xff] %v664
          %667 = vst [vmem:[%s404 + $0x8] sm:$0xff] %v665
        $region98: #{tpu_custom_call.1} parent=77 // pred_fallthru
          _
        %s668 = sand.u32 %s206, 1
        %s669 = scalar_lea.sflag [#allocation7], %s668
        %s670 = sand.u32 %s206, 1
        %s671 = smul.addr %s670, 16
        %s672 = scalar_lea.vmem [#allocation9], %s671
        // Predicated region
        $region99: #{tpu_custom_call.1} parent=77 // pred_check
          %p673 = pneg %p216
        $region100: #{tpu_custom_call.1} parent=77 // pred_check_branch
          %675 = sbr.rel (%p673) target = $region102
        $region101: #{tpu_custom_call.1} parent=77 // pred_region
          %s676 = smul.u32 2, %s33
          %s678 = ssub.s32 256, 256
          %679 = vsyncadd %s669, %s678
          %s680 = smul.addr %s676, 2
          %s681 = sadd.s32 %s32, %s680
          %s682 = smul.addr %s681, 128
          %s683 = scalar_lea.hbm %s7, %s682
          %s684 = sshll.u32 %s672, 4
          %s685 = int_to_ptr.vmem [resolvable:$true] %s684
          %690 = dma.vmem_to_hbm [thread:$0]  %s685, 256, %s683, %s669, 128, 256, 8
        $region102: #{tpu_custom_call.1} parent=77 // pred_fallthru
          _
      $region78: #{tpu_custom_call.1} parent=5 // pred_fallthru
        _
      %p691 = scmp.le.s32.totalorder 2, %s23
      // Predicated region
      $region103: #{tpu_custom_call.1} parent=5 // pred_check
        %p692 = pneg %p691
      $region104: #{tpu_custom_call.1} parent=5 // pred_check_branch
        %694 = sbr.rel (%p692) target = $region106
      $region105: #{tpu_custom_call.1} parent=5 // pred_region
        %s695 = ssub.s32 %s23, 2
        // Predicated region
        $region107: #{tpu_custom_call.1} parent=105 // pred_check
          %p696 = pneg %p222
        $region108: #{tpu_custom_call.1} parent=105 // pred_check_branch
          %698 = sbr.rel (%p696) target = $region110
        $region109: #{tpu_custom_call.1} parent=105 // pred_region
          %s699 = sand.u32 %s207, 1
          %s700 = scalar_lea.sflag [#allocation7], %s699
          %s701 = sand.u32 %s207, 1
          %s702 = smul.addr %s701, 16
          %s703 = scalar_lea.vmem [#allocation9], %s702
          %704 = dma.done %s700, 256
        $region110: #{tpu_custom_call.1} parent=105 // pred_fallthru
          _
      $region106: #{tpu_custom_call.1} parent=5 // pred_fallthru
        _
    $region6: #{tpu_custom_call.1} parent=1 // loop_footer
      %s27 = sadd.s32 1, %s23
    $region7: #{tpu_custom_call.1} parent=1 // loop_footer_branch
      %22 = sbr.rel target = $region3
    $region8: #{tpu_custom_call.1} parent=1 // loop_exit
      _
    %705 = vsyncpa [#allocation6], 1
    %s706 = scalar_lea.sflag [#allocation6], 1
    %707 = vsyncpa %s706, 1
    %708 = vsyncpa [#allocation7], 1
    %s709 = scalar_lea.sflag [#allocation7], 1
    %710 = vsyncpa %s709, 1

</llo_original>
